<compile_context>
chip_gen: v7x
topology: tpu7x:2x2x1
jax: 0.10.0
libtpu: 0.0.40
codegen_flags: <defaults>
</compile_context>

<pallas_src>
import jax
import jax.numpy as jnp
from jax import lax
from jax.experimental import pallas as pl
from jax.experimental.pallas import tpu as pltpu


def _round_up(x: int, m: int) -> int:
    return ((x + m - 1) // m) * m


def _vmem_limit_bytes() -> int:
    """Generation-aware scoped-VMEM budget for this call."""
    try:
        cap = int(pltpu.get_tpu_info().vmem_capacity_bytes)
    except Exception:  # pragma: no cover - conservative fallback
        cap = 64 * 1024 * 1024  # v7x per-core physical VMEM
    # 3/4 of physical: 96 MiB on v5e/v6e (128 MiB), 48 MiB on v7x (64 MiB).
    return min(cap * 3 // 4, 96 * 1024 * 1024)


def _choose_tiles(N: int, HW: int, itemsize: int, vmem_limit: int):
    """Pick (TN, TS, n_spatial, n_red) under the VMEM budget."""
    # Sublane packing alignment: 8 rows for 32-bit, 16 for bf16/f16, 32 for 8-bit.
    sub_align = max(8, 32 // itemsize)

    slack = 4 * 1024 * 1024                      # compiler-internal scratch headroom
    budget = max(8 * 1024 * 1024, vmem_limit - slack)
    tile_target = min(8 * 1024 * 1024, budget // 5)  # per-input-buffer bytes (native dtype)

    # Per-lane VMEM cost at minimum tile height:
    #   4 input buffers (2 inputs x double buffer) x sub_align rows x itemsize
    # + 2 x (8, TS) f32 accumulators (64 B)
    # + double-buffered (1, TS) f32 output, sublane-padded to 8 rows (64 B)
    per_lane_min = 4 * sub_align * itemsize + 128
    ts_cap = max(
        128,
        (min(tile_target // (sub_align * itemsize), budget // per_lane_min) // 128) * 128,
    )

    if HW <= ts_cap:
        TS = HW                                   # full lane extent: exempt from 128 rule
        n_spatial = 1
    else:
        TS = ts_cap                               # multiple of 128; last tile may be partial
        n_spatial = pl.cdiv(HW, TS)

    # Reduction tile height: fill the per-input tile budget, stay under the
    # joint VMEM budget, never taller than needed to cover N.
    TN = max(sub_align, ((tile_target // (TS * itemsize)) // sub_align) * sub_align)
    acc_out_bytes = 128 * TS                      # accumulators + padded output buffers
    max_tn = max(sub_align, (((budget - acc_out_bytes) // (4 * TS * itemsize)) // sub_align) * sub_align)
    TN = min(TN, max_tn)
    TN = min(TN, _round_up(N, sub_align))
    n_red = pl.cdiv(N, TN)
    return TN, TS, n_spatial, n_red


def _make_nrmse_kernel(N: int, TN: int, ragged: bool):
    def kernel(pred_ref, tgt_ref, out_ref, acc_d, acc_t):
        k = pl.program_id(1)
        TS = acc_d.shape[1]

        @pl.when(k == 0)
        def _():
            acc_d[...] = jnp.zeros_like(acc_d)
            acc_t[...] = jnp.zeros_like(acc_t)

        p = pred_ref[...].astype(jnp.float32)
        t = tgt_ref[...].astype(jnp.float32)
        d = p - t
        d2 = d * d
        t2 = t * t

        def accumulate(d2_v, t2_v):
            # Fold TN rows into 8 accumulator rows with sublane-aligned adds
            # (pure VALU in the steady state; no per-step cross-sublane reduce).
            acc_d[...] += d2_v.reshape(TN // 8, 8, TS).sum(axis=0)
            acc_t[...] += t2_v.reshape(TN // 8, 8, TS).sum(axis=0)

        last = pl.num_programs(1) - 1
        if ragged:
            # Mask rows >= N only on the last reduction step (partial tile
            # reads unspecified rows); earlier steps stay mask-free.
            @pl.when(k != last)
            def _():
                accumulate(d2, t2)

            @pl.when(k == last)
            def _():
                row = k * TN + lax.broadcasted_iota(jnp.int32, (TN, TS), 0)
                valid = row < N
                accumulate(jnp.where(valid, d2, 0.0), jnp.where(valid, t2, 0.0))
        else:
            accumulate(d2, t2)

        @pl.when(k == last)
        def _():
            sum_d = jnp.sum(acc_d[...], axis=0, keepdims=True)
            sum_t = jnp.sum(acc_t[...], axis=0, keepdims=True)
            # sqrt(mean)/sqrt(mean): the 1/N factors cancel.
            out_ref[...] = jnp.sqrt(sum_d / sum_t)

    return kernel


def nrmse_pallas(pred: jax.Array, target: jax.Array) -> jax.Array:
    """NRMSE reduced over dims (0, 1) of NCHW inputs -> (H, W) float32 output."""
    assert pred.shape == target.shape, "pred/target shapes must match"
    assert pred.ndim == 4, "expected NCHW inputs"
    assert pred.dtype == target.dtype, "pred/target dtypes must match"
    B, C, H, W = pred.shape
    N, HW = B * C, H * W

    # Free, contiguous reshape — no pad, no dtype change, no extra HBM pass.
    pred2 = pred.reshape(N, HW)
    tgt2 = target.reshape(N, HW)

    itemsize = jnp.dtype(pred.dtype).itemsize
    vmem_limit = _vmem_limit_bytes()
    TN, TS, n_spatial, n_red = _choose_tiles(N, HW, itemsize, vmem_limit)
    ragged = (n_red * TN != N)

    kernel = _make_nrmse_kernel(N=N, TN=TN, ragged=ragged)

    grid_spec = pltpu.PrefetchScalarGridSpec(
        num_scalar_prefetch=0,
        grid=(n_spatial, n_red),                 # reduction axis last
        in_specs=[
            pl.BlockSpec((TN, TS), lambda s, k: (k, s)),
            pl.BlockSpec((TN, TS), lambda s, k: (k, s)),
        ],
        out_specs=pl.BlockSpec((1, TS), lambda s, k: (0, s)),
        scratch_shapes=[
            pltpu.VMEM((8, TS), jnp.float32),    # sum |pred - target|^2 partials
            pltpu.VMEM((8, TS), jnp.float32),    # sum |target|^2 partials
        ],
    )

    out = pl.pallas_call(
        kernel,
        out_shape=jax.ShapeDtypeStruct((1, HW), jnp.float32),
        grid_spec=grid_spec,
        compiler_params=pltpu.CompilerParams(
            dimension_semantics=("parallel", "arbitrary"),
            vmem_limit_bytes=vmem_limit,
        ),
        cost_estimate=pl.CostEstimate(
            flops=5 * N * HW,
            transcendentals=2 * HW,
            bytes_accessed=2 * N * HW * itemsize + HW * 4,
        ),
    )(pred2, tgt2)

    return out[0].reshape(H, W)


class NRMSELossPallas:
    """Mirror of the PyTorch NRMSELoss module (dim=(0, 1)); no parameters."""

    def __init__(self, dim=(0, 1)):
        # Only the default dim=(0, 1) on 4-D NCHW inputs is implemented here.
        assert tuple(dim) == (0, 1), "kernel implements the default dim=(0, 1)"
        self.dim = tuple(dim)

    def __call__(self, pred: jax.Array, target: jax.Array) -> jax.Array:
        return nrmse_pallas(pred, target)


def _nrmse_ref(pred, target):
    d = jnp.mean(jnp.abs(pred - target) ** 2, axis=(0, 1))
    t = jnp.mean(jnp.abs(target) ** 2, axis=(0, 1))
    return jnp.sqrt(d) / jnp.sqrt(t)


if __name__ == "__main__":
    key = jax.random.PRNGKey(0)
    k1, k2, k3, k4 = jax.random.split(key, 4)

    # Case 1: f32, NCHW = (2, 4, 16, 16), N divides evenly.
    B, C, H, W = 2, 4, 16, 16
    pred = jax.random.normal(k1, (B, C, H, W), dtype=jnp.float32)
    target = jax.random.normal(k2, (B, C, H, W), dtype=jnp.float32)

    loss_fn = NRMSELossPallas(dim=(0, 1))
    out = jax.block_until_ready(loss_fn(pred, target))
    ref = _nrmse_ref(pred, target)
    assert out.shape == (H, W)
    assert jnp.allclose(out, ref, rtol=1e-5, atol=1e-5), "f32 mismatch vs JAX reference"

    # Case 2: bf16 inputs (native-dtype DMA, in-kernel upcast) with a ragged
    # reduction dim (N = 9 < TN) — exercises the last-step tail mask.
    B2, C2, H2, W2 = 3, 3, 16, 24
    pred_bf = jax.random.normal(k3, (B2, C2, H2, W2), dtype=jnp.float32).astype(jnp.bfloat16)
    tgt_bf = jax.random.normal(k4, (B2, C2, H2, W2), dtype=jnp.float32).astype(jnp.bfloat16)
    out_bf = jax.block_until_ready(nrmse_pallas(pred_bf, tgt_bf))
    ref_bf = _nrmse_ref(pred_bf.astype(jnp.float32), tgt_bf.astype(jnp.float32))
    assert out_bf.shape == (H2, W2)
    assert jnp.allclose(out_bf, ref_bf, rtol=5e-5, atol=5e-5), "bf16 mismatch vs JAX reference"

    print("KERNEL_OK")
</pallas_src>

<mosaic_0001>
module attributes {stable_mosaic.version = 11 : i64} {
  func.func @kernel(%arg0: i32, %arg1: i32, %arg2: memref<8x256xf32, #tpu.memory_space<vmem>>, %arg3: memref<8x256xf32, #tpu.memory_space<vmem>>, %arg4: memref<1x256xf32, #tpu.memory_space<vmem>>, %arg5: memref<8x256xf32, #tpu.memory_space<vmem>>, %arg6: memref<8x256xf32, #tpu.memory_space<vmem>>) attributes {dimension_semantics = [#tpu.dimension_semantics<parallel>, #tpu.dimension_semantics<arbitrary>], iteration_bounds = array<i64: 1, 1>, scalar_prefetch = 0 : i64, scratch_operands = 2 : i64, tpu.core_type = #tpu.core_type<tc>, window_params = [{transform_indices = @transform_0, window_bounds = array<i64: 8, 256>}, {transform_indices = @transform_1, window_bounds = array<i64: 8, 256>}, {transform_indices = @transform_2, window_bounds = array<i64: 1, 256>}]} {
    %c0_i32 = arith.constant 0 : i32
    %0 = arith.cmpi eq, %arg1, %c0_i32 : i32
    %1 = arith.extui %0 : i1 to i32
    %c0_i32_0 = arith.constant 0 : i32
    %2 = arith.cmpi ne, %1, %c0_i32_0 : i32
    scf.if %2 {
      %cst_15 = arith.constant 0.000000e+00 : f32
      %21 = vector.broadcast %cst_15 : f32 to vector<8x256xf32>
      %c0_16 = arith.constant 0 : index
      %c0_17 = arith.constant 0 : index
      %22 = vector.load %arg5[%c0_16, %c0_17] : memref<8x256xf32, #tpu.memory_space<vmem>>, vector<8x256xf32>
      tpu.vector_store %arg5[%c0_16, %c0_17], %21 {strides = array<i32>} : memref<8x256xf32, #tpu.memory_space<vmem>>, vector<8x256xf32>,
      %cst_18 = arith.constant 0.000000e+00 : f32
      %23 = vector.broadcast %cst_18 : f32 to vector<8x256xf32>
      %c0_19 = arith.constant 0 : index
      %c0_20 = arith.constant 0 : index
      %24 = vector.load %arg6[%c0_19, %c0_20] : memref<8x256xf32, #tpu.memory_space<vmem>>, vector<8x256xf32>
      tpu.vector_store %arg6[%c0_19, %c0_20], %23 {strides = array<i32>} : memref<8x256xf32, #tpu.memory_space<vmem>>, vector<8x256xf32>,
    } else {
    }
    %c0 = arith.constant 0 : index
    %c0_1 = arith.constant 0 : index
    %3 = vector.load %arg2[%c0, %c0_1] : memref<8x256xf32, #tpu.memory_space<vmem>>, vector<8x256xf32>
    %c0_2 = arith.constant 0 : index
    %c0_3 = arith.constant 0 : index
    %4 = vector.load %arg3[%c0_2, %c0_3] : memref<8x256xf32, #tpu.memory_space<vmem>>, vector<8x256xf32>
    %5 = arith.subf %3, %4 : vector<8x256xf32>
    %6 = arith.mulf %5, %5 : vector<8x256xf32>
    %7 = arith.mulf %4, %4 : vector<8x256xf32>
    %c0_4 = arith.constant 0 : index
    %c0_5 = arith.constant 0 : index
    %8 = vector.load %arg5[%c0_4, %c0_5] : memref<8x256xf32, #tpu.memory_space<vmem>>, vector<8x256xf32>
    %9 = vector.shape_cast %6 : vector<8x256xf32> to vector<1x8x256xf32>
    %cst = arith.constant dense<0.000000e+00> : vector<8x256xf32>
    %10 = vector.multi_reduction <add>, %9, %cst [0] : vector<1x8x256xf32> to vector<8x256xf32>
    %11 = arith.addf %8, %10 : vector<8x256xf32>
    %c0_6 = arith.constant 0 : index
    %c0_7 = arith.constant 0 : index
    %12 = vector.load %arg5[%c0_6, %c0_7] : memref<8x256xf32, #tpu.memory_space<vmem>>, vector<8x256xf32>
    tpu.vector_store %arg5[%c0_6, %c0_7], %11 {strides = array<i32>} : memref<8x256xf32, #tpu.memory_space<vmem>>, vector<8x256xf32>,
    %c0_8 = arith.constant 0 : index
    %c0_9 = arith.constant 0 : index
    %13 = vector.load %arg6[%c0_8, %c0_9] : memref<8x256xf32, #tpu.memory_space<vmem>>, vector<8x256xf32>
    %14 = vector.shape_cast %7 : vector<8x256xf32> to vector<1x8x256xf32>
    %cst_10 = arith.constant dense<0.000000e+00> : vector<8x256xf32>
    %15 = vector.multi_reduction <add>, %14, %cst_10 [0] : vector<1x8x256xf32> to vector<8x256xf32>
    %16 = arith.addf %13, %15 : vector<8x256xf32>
    %c0_11 = arith.constant 0 : index
    %c0_12 = arith.constant 0 : index
    %17 = vector.load %arg6[%c0_11, %c0_12] : memref<8x256xf32, #tpu.memory_space<vmem>>, vector<8x256xf32>
    tpu.vector_store %arg6[%c0_11, %c0_12], %16 {strides = array<i32>} : memref<8x256xf32, #tpu.memory_space<vmem>>, vector<8x256xf32>,
    %c0_i32_13 = arith.constant 0 : i32
    %18 = arith.cmpi eq, %arg1, %c0_i32_13 : i32
    %19 = arith.extui %18 : i1 to i32
    %c0_i32_14 = arith.constant 0 : i32
    %20 = arith.cmpi ne, %19, %c0_i32_14 : i32
    scf.if %20 {
      %c0_15 = arith.constant 0 : index
      %c0_16 = arith.constant 0 : index
      %21 = vector.load %arg5[%c0_15, %c0_16] : memref<8x256xf32, #tpu.memory_space<vmem>>, vector<8x256xf32>
      %cst_17 = arith.constant dense<0.000000e+00> : vector<256xf32>
      %22 = vector.multi_reduction <add>, %21, %cst_17 [0] : vector<8x256xf32> to vector<256xf32>
      %23 = vector.shape_cast %22 : vector<256xf32> to vector<1x256xf32>
      %c0_18 = arith.constant 0 : index
      %c0_19 = arith.constant 0 : index
      %24 = vector.load %arg6[%c0_18, %c0_19] : memref<8x256xf32, #tpu.memory_space<vmem>>, vector<8x256xf32>
      %cst_20 = arith.constant dense<0.000000e+00> : vector<256xf32>
      %25 = vector.multi_reduction <add>, %24, %cst_20 [0] : vector<8x256xf32> to vector<256xf32>
      %26 = vector.shape_cast %25 : vector<256xf32> to vector<1x256xf32>
      %27 = arith.divf %23, %26 : vector<1x256xf32>
      %28 = math.sqrt %27 : vector<1x256xf32>
      %c0_21 = arith.constant 0 : index
      %c0_22 = arith.constant 0 : index
      %29 = vector.load %arg4[%c0_21, %c0_22] : memref<1x256xf32, #tpu.memory_space<vmem>>, vector<1x256xf32>
      tpu.vector_store %arg4[%c0_21, %c0_22], %28 {strides = array<i32>} : memref<1x256xf32, #tpu.memory_space<vmem>>, vector<1x256xf32>,
    } else {
    }
    return
  }
  func.func @transform_0(%arg0: i32, %arg1: i32) -> (i32, i32) {
    %c0_i32 = arith.constant 0 : i32
    return %arg1, %arg0 : i32, i32
  }
  func.func @transform_1(%arg0: i32, %arg1: i32) -> (i32, i32) {
    %c0_i32 = arith.constant 0 : i32
    return %arg1, %arg0 : i32, i32
  }
  func.func @transform_2(%arg0: i32, %arg1: i32) -> (i32, i32) {
    %c0_i32 = arith.constant 0 : i32
    %c0_i32_0 = arith.constant 0 : i32
    return %c0_i32, %arg0 : i32, i32
  }
}

</mosaic_0001>

<llo_original>
// kernel: tpu_custom_call.1
$region0: #{tpu_custom_call.1}
  #allocation0 [shape = 'u32[]', space=smem, size = 0x4, offset = 0x4, fixed_abs, tag = 'smem constant byte address 0x4 - core index']
  #allocation1 [shape = 'u32[144,128]{1,0:T(1,128)}', space=vmem, size = 0x12000, scoped, tag = 'internal scratch']
  #allocation2 [shape = 'f32[8,256]{1,0:T(8,128)}', space=vmem, size = 0x2000, scoped, tag = 'scratch operand']
  #allocation3 [shape = 'f32[8,256]{1,0:T(8,128)}', space=vmem, size = 0x2000, scoped, tag = 'scratch operand']
  %s0 = inlined_call_operand.hbm [shape: f32[8,256], index: 0, kind: input, shape index: {}]
  %s1 = inlined_call_operand.hbm [shape: f32[8,256], index: 1, kind: input, shape index: {}]
  %s2 = inlined_call_operand.hbm [shape: f32[1,256], index: 2, kind: output, shape index: {}]
  %s3 = sld [smem:[#allocation0]]
  $region34: #{tpu_custom_call.1} parent=0
    _
  %s5 = ssub.s32 1, %s3
  %s6 = scalar_select 0, %s5, %s3
  $region1: #{tpu_custom_call.1} parent=0
    #allocation4 [shape = 'u8[8192]{0}', space=vmem, size = 0x2000, scoped, tag = 'input window, operand 0, single buffered']
    #allocation5 [shape = 's32[1]{0}', space=sflag, size = 0x4, scoped, tag = 'scoped memory for tpu_custom_call.1']
    #allocation6 [shape = 's32[1]{0}', space=sflag, size = 0x4, scoped, tag = 'scoped memory for tpu_custom_call.1']
    #allocation7 [shape = 'u8[8192]{0}', space=vmem, size = 0x2000, scoped, tag = 'input window, operand 1, single buffered']
    #allocation8 [shape = 's32[1]{0}', space=sflag, size = 0x4, scoped, tag = 'scoped memory for tpu_custom_call.1']
    #allocation9 [shape = 'u8[1024]{0}', space=vmem, size = 0x400, scoped, tag = 'output window, operand 0, single buffered']
    %7 = vsyncpa [#allocation5], 0
    %8 = vsyncpa [#allocation8], 0
    %9 = vsyncpa [#allocation6], 0
    // Predicated region
    $region2: #{tpu_custom_call.1} parent=1 // pred_check
      _
    $region3: #{tpu_custom_call.1} parent=1 // pred_check_branch
      %11 = sbr.rel (0) target = $region5
    $region4: #{tpu_custom_call.1} parent=1 // pred_region
      %s13 = ssub.s32 256, 256
      %14 = vsyncadd [#allocation5], %s13
      %s16 = sshll.u32 [#allocation4], 4
      %s17 = int_to_ptr.vmem [resolvable:$true] %s16
      %19 = dma.hbm_to_vmem [thread:$0]  %s0, 256, %s17, [#allocation5]
    $region5: #{tpu_custom_call.1} parent=1 // pred_fallthru
      _
    // Predicated region
    $region6: #{tpu_custom_call.1} parent=1 // pred_check
      _
    $region7: #{tpu_custom_call.1} parent=1 // pred_check_branch
      %21 = sbr.rel (0) target = $region9
    $region8: #{tpu_custom_call.1} parent=1 // pred_region
      %s23 = ssub.s32 256, 256
      %24 = vsyncadd [#allocation8], %s23
      %s26 = sshll.u32 [#allocation7], 4
      %s27 = int_to_ptr.vmem [resolvable:$true] %s26
      %29 = dma.hbm_to_vmem [thread:$0]  %s1, 256, %s27, [#allocation8]
    $region9: #{tpu_custom_call.1} parent=1 // pred_fallthru
      _
    // Predicated region
    $region10: #{tpu_custom_call.1} parent=1 // pred_check
      _
    $region11: #{tpu_custom_call.1} parent=1 // pred_check_branch
      %31 = sbr.rel (0) target = $region13
    $region12: #{tpu_custom_call.1} parent=1 // pred_region
      %32 = dma.done [#allocation5], 256
    $region13: #{tpu_custom_call.1} parent=1 // pred_fallthru
      _
    // Predicated region
    $region14: #{tpu_custom_call.1} parent=1 // pred_check
      _
    $region15: #{tpu_custom_call.1} parent=1 // pred_check_branch
      %34 = sbr.rel (0) target = $region17
    $region16: #{tpu_custom_call.1} parent=1 // pred_region
      %35 = dma.done [#allocation8], 256
    $region17: #{tpu_custom_call.1} parent=1 // pred_fallthru
      _
    %p36 = scmp.eq.s32.totalorder 0, 0
    // Predicated region
    $region18: #{tpu_custom_call.1} parent=1 // pred_check
      %p37 = pneg %p36
    $region19: #{tpu_custom_call.1} parent=1 // pred_check_branch
      %39 = sbr.rel (%p37) target = $region21
    $region20: #{tpu_custom_call.1} parent=1 // pred_region
      %40 = vst [vmem:[#allocation2] sm:$0xff] 0.0
      %41 = vst [vmem:[#allocation2 + $0x8] sm:$0xff] 0.0
      %42 = vst [vmem:[#allocation3] sm:$0xff] 0.0
      %43 = vst [vmem:[#allocation3 + $0x8] sm:$0xff] 0.0
    $region21: #{tpu_custom_call.1} parent=1 // pred_fallthru
      _
    %v44 = vld [vmem:[#allocation4] sm:$0xff]
    %v45 = vld [vmem:[#allocation4 + $0x8] sm:$0xff]
    %v46 = vld [vmem:[#allocation7] sm:$0xff]
    %v47 = vld [vmem:[#allocation7 + $0x8] sm:$0xff]
    %v48 = vsub.f32 %v44, %v46
    %v49 = vsub.f32 %v45, %v47
    %v50 = vmul.f32 %v48, %v48
    %v51 = vmul.f32 %v49, %v49
    %v52 = vmul.f32 %v46, %v46
    %v53 = vmul.f32 %v47, %v47
    %v54 = vld [vmem:[#allocation2] sm:$0xff]
    %v55 = vld [vmem:[#allocation2 + $0x8] sm:$0xff]
    %v56 = vadd.f32 %v50, 0.0
    %v57 = vadd.f32 %v51, 0.0
    %v58 = vadd.f32 %v54, %v56
    %v59 = vadd.f32 %v55, %v57
    %60 = vst [vmem:[#allocation2] sm:$0xff] %v58
    %61 = vst [vmem:[#allocation2 + $0x8] sm:$0xff] %v59
    %v62 = vld [vmem:[#allocation3] sm:$0xff]
    %v63 = vld [vmem:[#allocation3 + $0x8] sm:$0xff]
    %v64 = vadd.f32 %v52, 0.0
    %v65 = vadd.f32 %v53, 0.0
    %v66 = vadd.f32 %v62, %v64
    %v67 = vadd.f32 %v63, %v65
    %68 = vst [vmem:[#allocation3] sm:$0xff] %v66
    %69 = vst [vmem:[#allocation3 + $0x8] sm:$0xff] %v67
    // Predicated region
    $region22: #{tpu_custom_call.1} parent=1 // pred_check
      %p70 = pneg %p36
    $region23: #{tpu_custom_call.1} parent=1 // pred_check_branch
      %72 = sbr.rel (%p70) target = $region25
    $region24: #{tpu_custom_call.1} parent=1 // pred_region
      %v73 = vld [vmem:[#allocation2] sm:$0xff]
      %v74 = vld [vmem:[#allocation2 + $0x8] sm:$0xff]
      %v75 = vrot.slane %v73, 4
      %v76 = vadd.f32 %v73, %v75
      %v77 = vrot.slane %v76, 2
      %v78 = vadd.f32 %v76, %v77
      %v79 = vrot.slane %v78, 1
      %v80 = vadd.f32 %v78, %v79
      %v81 = vrot.slane %v74, 4
      %v82 = vadd.f32 %v74, %v81
      %v83 = vrot.slane %v82, 2
      %v84 = vadd.f32 %v82, %v83
      %v85 = vrot.slane %v84, 1
      %v86 = vadd.f32 %v84, %v85
      %v87 = vld [vmem:[#allocation3] sm:$0xff]
      %v88 = vld [vmem:[#allocation3 + $0x8] sm:$0xff]
      %v89 = vrot.slane %v87, 4
      %v90 = vadd.f32 %v87, %v89
      %v91 = vrot.slane %v90, 2
      %v92 = vadd.f32 %v90, %v91
      %v93 = vrot.slane %v92, 1
      %v94 = vadd.f32 %v92, %v93
      %v95 = vrot.slane %v88, 4
      %v96 = vadd.f32 %v88, %v95
      %v97 = vrot.slane %v96, 2
      %v98 = vadd.f32 %v96, %v97
      %v99 = vrot.slane %v98, 1
      %v100 = vadd.f32 %v98, %v99
      %v101 = vrcp.pop %v94
      %v102 = vmul.f32 %v80, %v101
      %v103 = vrcp.pop %v100
      %v104 = vmul.f32 %v86, %v103
      %v105 = vrsqrt.pop %v102
      %v106 = vmul.f32 %v102, %v105
      %vm107 = vcmp.eq.f32.partialorder %v102, inf
      %v108 = vsel %vm107, %v102, %v106
      %vm109 = vcmp.eq.f32.partialorder %v102, 0.0
      %v110 = vand.u32 %v102, 2147483648
      %v111 = vsel %vm109, %v110, %v108
      %v112 = vrsqrt.pop %v104
      %v113 = vmul.f32 %v104, %v112
      %vm114 = vcmp.eq.f32.partialorder %v104, inf
      %v115 = vsel %vm114, %v104, %v113
      %vm116 = vcmp.eq.f32.partialorder %v104, 0.0
      %v117 = vand.u32 %v104, 2147483648
      %v118 = vsel %vm116, %v117, %v115
      %v121 = vcombine.low %v111, %v118
      %v123 = vunpack.c.l.s4 1966171168
      %v124 = vunpack.c.0.s8 %v123
      %v125 = vlaneseq
      %v126 = vshrl.u32 %v125, 7
      %v127 = vsub.s32 %v124, %v126
      %v128 = vrot.slane %v121, %v127
      %v130 = vunpack.c.l.s4 1966171168
      %v131 = vunpack.c.0.s8 %v130
      %v132 = vlaneseq
      %v133 = vshrl.u32 %v132, 7
      %v134 = vsub.s32 %v131, %v133
      %v135 = vrot.slane %v128, %v134
      %v137 = vlaneseq
      %vm138 = vcmp.ge.s32.totalorder %v137, 0
      %vm139 = vcmp.lt.s32.totalorder %v137, 256
      %vm140 = vmand %vm138, %vm139
      %141 = vst.msk [vmem:[#allocation9] sm:$0x3] %vm140, %v135
    $region25: #{tpu_custom_call.1} parent=1 // pred_fallthru
      _
    // Predicated region
    $region26: #{tpu_custom_call.1} parent=1 // pred_check
      _
    $region27: #{tpu_custom_call.1} parent=1 // pred_check_branch
      %143 = sbr.rel (0) target = $region29
    $region28: #{tpu_custom_call.1} parent=1 // pred_region
      %s145 = ssub.s32 32, 32
      %146 = vsyncadd [#allocation6], %s145
      %s148 = sshll.u32 [#allocation9], 4
      %s149 = int_to_ptr.vmem [resolvable:$true] %s148
      %151 = dma.vmem_to_hbm [thread:$0]  %s149, 32, %s2, [#allocation6]
    $region29: #{tpu_custom_call.1} parent=1 // pred_fallthru
      _
    // Predicated region
    $region30: #{tpu_custom_call.1} parent=1 // pred_check
      _
    $region31: #{tpu_custom_call.1} parent=1 // pred_check_branch
      %153 = sbr.rel (0) target = $region33
    $region32: #{tpu_custom_call.1} parent=1 // pred_region
      %154 = dma.done [#allocation6], 32
    $region33: #{tpu_custom_call.1} parent=1 // pred_fallthru
      _
    %155 = vsyncpa [#allocation5], 1
    %156 = vsyncpa [#allocation8], 1
    %157 = vsyncpa [#allocation6], 1

</llo_original>
